<compile_context>
chip_gen: v5e
topology: v5e:2x2
jax: 0.10.0
libtpu: 0.0.40
codegen_flags: <defaults>
</compile_context>

<pallas_src>
import jax
import jax.numpy as jnp
from jax.experimental import pallas as pl
from jax.experimental.pallas import tpu as pltpu


def _round_up(x, m):
    return ((x + m - 1) // m) * m


def _feature_projection_kernel(x_ref, w_ref, b_ref, o_ref):
    # x_ref: (tm, K)   w_ref: (K, tn)   b_ref: (1, tn)   o_ref: (tm, tn)
    x = x_ref[...].astype(jnp.float32)

    # LayerNorm statistics over the feature axis, single reduction pass:
    #   var = E[x^2] - mean^2   (eps = 1e-5, PyTorch default).
    mean = jnp.mean(x, axis=-1, keepdims=True)
    mean_sq = jnp.mean(x * x, axis=-1, keepdims=True)
    var = mean_sq - mean * mean
    xn = (x - mean) * jax.lax.rsqrt(var + 1e-5)

    # Projection (gamma/beta already folded into w/b by the wrapper).  The
    # wrapper chooses w_ref.dtype (bf16 for the MXU when inputs arrive as f32).
    y = jnp.dot(xn.astype(w_ref.dtype), w_ref[...],
                preferred_element_type=jnp.float32)
    y = y + b_ref[...]

    # Dropout: identity in eval mode.
    o_ref[...] = y.astype(o_ref.dtype)


def feature_projection(x, gamma, beta, weight, bias, *, tm=1024, mxu_bf16=True):
    """x: [B, T, K] -> [B, T, N].  weight: [K, N], bias: [N], gamma/beta: [K]."""
    B, T, K = x.shape
    N = weight.shape[1]
    M = B * T

    x_item = jnp.dtype(x.dtype).itemsize
    out_dtype = x.dtype

    # MXU operand dtype: the MXU is bf16-native; when both operands arrive as
    # f32 we down-cast for the matmul and keep an f32 accumulator.
    # TODO(synk): int8/fp8 weights would need explicit (de)quant scales here.
    if mxu_bf16 and weight.dtype == jnp.float32 and x.dtype == jnp.float32:
        mxu_dtype = jnp.bfloat16
    else:
        mxu_dtype = weight.dtype

    # Fold the LayerNorm affine into the projection (done once, in f32).
    w_f32 = weight.astype(jnp.float32)
    w_mat = (gamma.astype(jnp.float32)[:, None] * w_f32).astype(mxu_dtype)
    b_vec = beta.astype(jnp.float32) @ w_f32 + bias.astype(jnp.float32)

    # Lane-dense output: pad N up to a multiple of 128 with zero weight columns
    # / zero bias; avoids masked vst partial stores on the output side.
    n_pad = _round_up(N, 128)
    if n_pad != N:
        w_mat = jnp.pad(w_mat, ((0, 0), (0, n_pad - N)))
        b_vec = jnp.pad(b_vec, (0, n_pad - N))
    b_mat = b_vec.reshape(1, n_pad)
    w_item = jnp.dtype(w_mat.dtype).itemsize

    # Physical VMEM per core (v5e/v6e: 128 MiB, v7x: 64 MiB).
    try:
        vmem_cap = int(pltpu.get_tpu_info().vmem_capacity_bytes)
    except Exception:
        vmem_cap = 64 << 20  # conservative fallback

    # N split: keep the (K, tn) weight tile under ~1/3 of VMEM; tn is a
    # multiple of 128 that divides n_pad so every output tile stays lane-dense.
    w_budget = vmem_cap // 3
    tn = n_pad
    if K * n_pad * w_item > w_budget:
        tn = 128
        cand = 128
        while cand <= n_pad:
            if n_pad % cand == 0 and K * cand * w_item <= w_budget:
                tn = cand
            cand += 128
    grid_n = n_pad // tn

    # Row tiling: dtype-appropriate sublane minimum; large tile for low
    # per-step overhead; capped so grid_m >= 2 once M is large enough.
    sub = max(8, 32 // x_item)  # 8 (f32) / 16 (bf16) / 32 (int8)
    x2 = x.reshape(M, K)
    m_rows = M
    if M < sub:  # tiny-M edge case: pad up to one minimal tile
        x2 = jnp.pad(x2, ((0, sub - M), (0, 0)))
        m_rows = sub
    tm_req = tm
    if m_rows > 2 * sub:
        tm_req = min(tm, _round_up(pl.cdiv(m_rows, 2), 256))
    tm_eff = max(sub, min(tm_req, (m_rows // sub) * sub))
    tm_eff = (tm_eff // sub) * sub
    grid_m = pl.cdiv(m_rows, tm_eff)

    # Itemized VMEM budget: pipelined x/out tiles, weight/bias tiles, and the
    # f32 working set the kernel actually materializes; plus headroom.  Never
    # ask for more than ~85% of physical VMEM (leave compiler scratch room).
    w_bufs = 1 if grid_n == 1 else 2
    mxu_item = jnp.dtype(mxu_dtype).itemsize
    est = (2 * tm_eff * K * x_item            # double-buffered x tiles
           + 2 * tm_eff * tn * x_item         # double-buffered out tiles
           + w_bufs * K * tn * w_item         # resident / tiled weight
           + 2 * tn * 4                       # bias tiles
           + 3 * tm_eff * K * 4               # f32 x / centered / xn
           + tm_eff * K * mxu_item            # matmul-dtype copy of xn
           + tm_eff * tn * 4)                 # f32 accumulator
    vmem_limit = min(max(est + est // 4 + (8 << 20), 32 << 20),
                     int(vmem_cap * 0.85))

    cost = pl.CostEstimate(
        flops=2 * M * K * N + 7 * M * K,
        transcendentals=M,
        bytes_accessed=(M * K * x_item + K * n_pad * w_item
                        + M * n_pad * x_item + n_pad * 4),
    )

    # Grid-invariant operands are single-buffered (no double-buffer waste).
    inv_kwargs = dict(pipeline_mode=pl.Buffered(1)) if grid_n == 1 else {}
    # TODO(synk): if profiling on v6e shows exposed DMA at large tm, sweep
    # pipeline_mode=pl.Buffered(3) on the x BlockSpec below.

    out = pl.pallas_call(
        _feature_projection_kernel,
        out_shape=jax.ShapeDtypeStruct((m_rows, n_pad), out_dtype),
        grid_spec=pltpu.PrefetchScalarGridSpec(
            num_scalar_prefetch=0,
            grid=(grid_m, grid_n),
            in_specs=[
                pl.BlockSpec((tm_eff, K), lambda i, j: (i, 0)),       # x rows
                pl.BlockSpec((K, tn), lambda i, j: (0, j),
                             **inv_kwargs),                           # weight
                pl.BlockSpec((1, tn), lambda i, j: (0, j),
                             **inv_kwargs),                           # bias
            ],
            out_specs=pl.BlockSpec((tm_eff, tn), lambda i, j: (i, j)),
        ),
        compiler_params=pltpu.CompilerParams(
            dimension_semantics=("parallel", "parallel"),
            vmem_limit_bytes=vmem_limit,
        ),
        cost_estimate=cost,
    )(x2, w_mat, b_mat)

    if m_rows != M:
        out = out[:M]
    if n_pad != N:
        out = out[:, :N]
    return out.reshape(B, T, N)


def _reference(x, gamma, beta, weight, bias):
    xf = x.astype(jnp.float32)
    mean = jnp.mean(xf, axis=-1, keepdims=True)
    var = jnp.mean((xf - mean) ** 2, axis=-1, keepdims=True)
    xn = (xf - mean) / jnp.sqrt(var + 1e-5)
    xn = xn * gamma + beta
    return xn @ weight + bias


if __name__ == "__main__":
    key = jax.random.PRNGKey(0)
    K, N = 32, 64  # in_features, out_features (N < 128 exercises lane padding)

    k_x, k_w, k_b, k_g, k_bt, k_x2 = jax.random.split(key, 6)
    bound = 1.0 / (K ** 0.5)
    weight = jax.random.uniform(k_w, (K, N), jnp.float32, -bound, bound)
    bias = jax.random.uniform(k_b, (N,), jnp.float32, -bound, bound)
    # Non-trivial affine so the gamma/beta folding is actually exercised.
    gamma = 1.0 + 0.1 * jax.random.normal(k_g, (K,), jnp.float32)
    beta = 0.1 * jax.random.normal(k_bt, (K,), jnp.float32)

    # Case 1: batch*frame divides the row tile exactly (bf16 MXU path).
    x = jax.random.normal(k_x, (2, 8, K), dtype=jnp.float32)
    out = jax.block_until_ready(feature_projection(x, gamma, beta, weight, bias))
    ref = _reference(x, gamma, beta, weight, bias)
    assert out.shape == (2, 8, N)
    assert jnp.allclose(out, ref, atol=2e-2, rtol=2e-2), "mismatch (even case)"

    # Case 2: ragged batch*frame -> partial last row block (no wrapper pad).
    xr = jax.random.normal(k_x2, (3, 7, K), dtype=jnp.float32)
    outr = jax.block_until_ready(feature_projection(xr, gamma, beta, weight, bias))
    refr = _reference(xr, gamma, beta, weight, bias)
    assert outr.shape == (3, 7, N)
    assert jnp.allclose(outr, refr, atol=2e-2, rtol=2e-2), "mismatch (ragged case)"

    # Case 3: exact f32 matmul path (mxu_bf16=False) at tight tolerance.
    oute = jax.block_until_ready(
        feature_projection(xr, gamma, beta, weight, bias, mxu_bf16=False))
    assert jnp.allclose(oute, refr, atol=1e-4, rtol=1e-4), "mismatch (f32 path)"

    print("KERNEL_OK")
</pallas_src>

<mosaic_0001>
module attributes {stable_mosaic.version = 11 : i64} {
  func.func @_feature_projection_kernel(%arg0: i32, %arg1: i32, %arg2: memref<16x32xf32, #tpu.memory_space<vmem>>, %arg3: memref<32x128xbf16, #tpu.memory_space<vmem>>, %arg4: memref<1x128xf32, #tpu.memory_space<vmem>>, %arg5: memref<16x128xf32, #tpu.memory_space<vmem>>) attributes {dimension_semantics = [#tpu.dimension_semantics<parallel>, #tpu.dimension_semantics<parallel>], iteration_bounds = array<i64: 1, 1>, scalar_prefetch = 0 : i64, scratch_operands = 0 : i64, tpu.core_type = #tpu.core_type<tc>, window_params = [{transform_indices = @transform_0, window_bounds = array<i64: 16, 32>}, {pipeline_mode = #tpu.pipeline_mode<synchronous>, transform_indices = @transform_1, window_bounds = array<i64: 32, 128>}, {pipeline_mode = #tpu.pipeline_mode<synchronous>, transform_indices = @transform_2, window_bounds = array<i64: 1, 128>}, {transform_indices = @transform_3, window_bounds = array<i64: 16, 128>}]} {
    %c0 = arith.constant 0 : index
    %c0_0 = arith.constant 0 : index
    %0 = vector.load %arg2[%c0, %c0_0] : memref<16x32xf32, #tpu.memory_space<vmem>>, vector<16x32xf32>
    %cst = arith.constant dense<0.000000e+00> : vector<16xf32>
    %1 = vector.multi_reduction <add>, %0, %cst [1] : vector<16x32xf32> to vector<16xf32>
    %2 = vector.shape_cast %1 : vector<16xf32> to vector<16x1xf32>
    %cst_1 = arith.constant 3.200000e+01 : f32
    %3 = vector.broadcast %cst_1 : f32 to vector<16x1xf32>
    %4 = arith.divf %2, %3 : vector<16x1xf32>
    %5 = arith.mulf %0, %0 : vector<16x32xf32>
    %cst_2 = arith.constant dense<0.000000e+00> : vector<16xf32>
    %6 = vector.multi_reduction <add>, %5, %cst_2 [1] : vector<16x32xf32> to vector<16xf32>
    %7 = vector.shape_cast %6 : vector<16xf32> to vector<16x1xf32>
    %cst_3 = arith.constant 3.200000e+01 : f32
    %8 = vector.broadcast %cst_3 : f32 to vector<16x1xf32>
    %9 = arith.divf %7, %8 : vector<16x1xf32>
    %10 = arith.mulf %4, %4 : vector<16x1xf32>
    %11 = arith.subf %9, %10 : vector<16x1xf32>
    %12 = vector.broadcast %4 : vector<16x1xf32> to vector<16x32xf32>
    %13 = arith.subf %0, %12 : vector<16x32xf32>
    %cst_4 = arith.constant 9.99999974E-6 : f32
    %14 = vector.broadcast %cst_4 : f32 to vector<16x1xf32>
    %15 = arith.addf %11, %14 : vector<16x1xf32>
    %16 = math.rsqrt %15 : vector<16x1xf32>
    %17 = vector.broadcast %16 : vector<16x1xf32> to vector<16x32xf32>
    %18 = arith.mulf %13, %17 : vector<16x32xf32>
    %19 = arith.truncf %18 : vector<16x32xf32> to vector<16x32xbf16>
    %c0_5 = arith.constant 0 : index
    %c0_6 = arith.constant 0 : index
    %20 = vector.load %arg3[%c0_5, %c0_6] : memref<32x128xbf16, #tpu.memory_space<vmem>>, vector<32x128xbf16>
    %cst_7 = arith.constant dense<0.000000e+00> : vector<16x128xf32>
    %21 = tpu.matmul %19, %20, %cst_7 {dimension_numbers = #tpu.dot_dimension_numbers<[1], [0], [0], [1], [0, 0, 1, 1], [], []>} : vector<16x32xbf16>, vector<32x128xbf16>, vector<16x128xf32> -> vector<16x128xf32>
    %c0_8 = arith.constant 0 : index
    %c0_9 = arith.constant 0 : index
    %22 = vector.load %arg4[%c0_8, %c0_9] : memref<1x128xf32, #tpu.memory_space<vmem>>, vector<1x128xf32>
    %23 = vector.broadcast %22 : vector<1x128xf32> to vector<16x128xf32>
    %24 = arith.addf %21, %23 : vector<16x128xf32>
    %c0_10 = arith.constant 0 : index
    %c0_11 = arith.constant 0 : index
    %25 = vector.load %arg5[%c0_10, %c0_11] : memref<16x128xf32, #tpu.memory_space<vmem>>, vector<16x128xf32>
    tpu.vector_store %arg5[%c0_10, %c0_11], %24 {strides = array<i32>} : memref<16x128xf32, #tpu.memory_space<vmem>>, vector<16x128xf32>,
    return
  }
  func.func @transform_0(%arg0: i32, %arg1: i32) -> (i32, i32) {
    %c0_i32 = arith.constant 0 : i32
    %c0_i32_0 = arith.constant 0 : i32
    return %arg0, %c0_i32 : i32, i32
  }
  func.func @transform_1(%arg0: i32, %arg1: i32) -> (i32, i32) {
    %c0_i32 = arith.constant 0 : i32
    %c0_i32_0 = arith.constant 0 : i32
    return %c0_i32, %arg1 : i32, i32
  }
  func.func @transform_2(%arg0: i32, %arg1: i32) -> (i32, i32) {
    %c0_i32 = arith.constant 0 : i32
    %c0_i32_0 = arith.constant 0 : i32
    return %c0_i32, %arg1 : i32, i32
  }
  func.func @transform_3(%arg0: i32, %arg1: i32) -> (i32, i32) {
    %c0_i32 = arith.constant 0 : i32
    return %arg0, %arg1 : i32, i32
  }
}

</mosaic_0001>

<llo_original>
// kernel: tpu_custom_call.1
$region0: #{tpu_custom_call.1}
  #allocation0 [shape = 'u32[]', space=smem, size = 0x4, offset = 0x4, fixed_abs, tag = 'smem constant byte address 0x4 - core index']
  #allocation1 [shape = 'u32[72,128]{1,0:T(1,128)}', space=vmem, size = 0x9000, scoped, tag = 'internal scratch']
  %s0 = inlined_call_operand.hbm [shape: f32[16,32], index: 0, kind: input, shape index: {}]
  %s1 = inlined_call_operand.hbm [shape: bf16[32,128], index: 1, kind: input, shape index: {}]
  %s2 = inlined_call_operand.vmem [shape: f32[1,128], index: 2, kind: input, shape index: {}]
  %s3 = inlined_call_operand.hbm [shape: f32[16,128], index: 3, kind: output, shape index: {}]
  %s4 = sld [smem:[#allocation0]]
  $region30: #{tpu_custom_call.1} parent=0
    _
  %s6 = ssub.s32 1, %s4
  %s7 = scalar_select 0, %s6, %s4
  $region1: #{tpu_custom_call.1} parent=0
    #allocation2 [shape = 'u8[8192]{0}', space=vmem, size = 0x2000, scoped, tag = 'input window, operand 0, single buffered']
    #allocation3 [shape = 's32[1]{0}', space=sflag, size = 0x4, scoped, tag = 'scoped memory for tpu_custom_call.1']
    #allocation4 [shape = 's32[1]{0}', space=sflag, size = 0x4, scoped, tag = 'scoped memory for tpu_custom_call.1']
    #allocation5 [shape = 'u8[8192]{0}', space=vmem, size = 0x2000, scoped, tag = 'input window, operand 1, single buffered']
    #allocation6 [shape = 's32[1]{0}', space=sflag, size = 0x4, scoped, tag = 'scoped memory for tpu_custom_call.1']
    #allocation7 [shape = 'u8[8192]{0}', space=vmem, size = 0x2000, scoped, tag = 'output window, operand 0, single buffered']
    %8 = vsyncpa [#allocation3], 0
    %9 = vsyncpa [#allocation6], 0
    %10 = vsyncpa [#allocation4], 0
    // Predicated region
    $region2: #{tpu_custom_call.1} parent=1 // pred_check
      _
    $region3: #{tpu_custom_call.1} parent=1 // pred_check_branch
      %12 = sbr.rel (0) target = $region5
    $region4: #{tpu_custom_call.1} parent=1 // pred_region
      %14 = vsyncadd [#allocation3], 0
      %s15 = sshll.u32 %s0, 4
      %s16 = int_to_ptr.hbm [resolvable:$true] %s15
      %s17 = sshll.u32 [#allocation2], 4
      %s18 = int_to_ptr.vmem [resolvable:$true] %s17
      %23 = dma.hbm_to_vmem [thread:$0]  %s16, 256, %s18, [#allocation3], 128, 128, 8
    $region5: #{tpu_custom_call.1} parent=1 // pred_fallthru
      _
    // Predicated region
    $region6: #{tpu_custom_call.1} parent=1 // pred_check
      _
    $region7: #{tpu_custom_call.1} parent=1 // pred_check_branch
      %25 = sbr.rel (0) target = $region9
    $region8: #{tpu_custom_call.1} parent=1 // pred_region
      %27 = vsyncadd [#allocation6], 0
      %s28 = sshll.u32 %s1, 4
      %s29 = int_to_ptr.hbm [resolvable:$true] %s28
      %s30 = sshll.u32 [#allocation5], 4
      %s31 = int_to_ptr.vmem [resolvable:$true] %s30
      %36 = dma.hbm_to_vmem [thread:$0]  %s29, 256, %s31, [#allocation6], 64, 64, 4
    $region9: #{tpu_custom_call.1} parent=1 // pred_fallthru
      _
    // Predicated region
    $region10: #{tpu_custom_call.1} parent=1 // pred_check
      _
    $region11: #{tpu_custom_call.1} parent=1 // pred_check_branch
      %38 = sbr.rel (0) target = $region13
    $region12: #{tpu_custom_call.1} parent=1 // pred_region
      _
    $region13: #{tpu_custom_call.1} parent=1 // pred_fallthru
      _
    // Predicated region
    $region14: #{tpu_custom_call.1} parent=1 // pred_check
      _
    $region15: #{tpu_custom_call.1} parent=1 // pred_check_branch
      %40 = sbr.rel (0) target = $region17
    $region16: #{tpu_custom_call.1} parent=1 // pred_region
      %42 = dma.done [#allocation3], 256
    $region17: #{tpu_custom_call.1} parent=1 // pred_fallthru
      _
    // Predicated region
    $region18: #{tpu_custom_call.1} parent=1 // pred_check
      _
    $region19: #{tpu_custom_call.1} parent=1 // pred_check_branch
      %44 = sbr.rel (0) target = $region21
    $region20: #{tpu_custom_call.1} parent=1 // pred_region
      %46 = dma.done [#allocation6], 256
    $region21: #{tpu_custom_call.1} parent=1 // pred_fallthru
      _
    %v48 = vld [vmem:[#allocation2] sm:$0xff]
    %v49 = vld [vmem:[#allocation2 + $0x8] sm:$0xff]
    %vm50 = vcmask 261120
    %v51 = vsel %vm50, %v48, 0.0
    %52 = vadd.xlane.f32.xlu0 %v51
    %v53 = vpop.xlane.xlu0 %52
    %v54 = vsel %vm50, %v49, 0.0
    %55 = vadd.xlane.f32.xlu0 %v54
    %v56 = vpop.xlane.xlu0 %55
    %v57 = vrcp.pop 32.0
    %v58 = vmul.f32 32.0, %v57
    %v59 = vsub.f32 1.0, %v58
    %v60 = vmul.f32 %v57, %v59
    %v61 = vadd.f32 %v57, %v60
    %vm62 = vweird.f32 %v57
    %v63 = vsel %vm62, %v57, %v61
    %v64 = vmul.f32 %v53, %v63
    %v65 = vmul.f32 %v56, %v63
    %v66 = vmul.f32 %v48, %v48
    %v67 = vmul.f32 %v49, %v49
    %v68 = vsel %vm50, %v66, 0.0
    %69 = vadd.xlane.f32.xlu0 %v68
    %v70 = vpop.xlane.xlu0 %69
    %v71 = vsel %vm50, %v67, 0.0
    %72 = vadd.xlane.f32.xlu0 %v71
    %v73 = vpop.xlane.xlu0 %72
    %v74 = vmul.f32 %v70, %v63
    %v75 = vmul.f32 %v73, %v63
    %v76 = vmul.f32 %v64, %v64
    %v77 = vmul.f32 %v65, %v65
    %v78 = vsub.f32 %v74, %v76
    %v79 = vsub.f32 %v75, %v77
    %v80 = vsub.f32 %v48, %v64
    %v81 = vsub.f32 %v49, %v65
    %v82 = vadd.f32 %v78, 1e-05
    %v83 = vadd.f32 %v79, 1e-05
    %v84 = vrsqrt.pop %v82
    %v85 = vmul.f32 %v84, %v82
    %v86 = vmul.f32 %v85, %v84
    %v87 = vmul.f32 0.5, %v86
    %v88 = vsub.f32 1.5, %v87
    %v89 = vmul.f32 %v84, %v88
    %vm90 = vweird.f32 %v82
    %vm91 = vweird.f32 %v84
    %vm92 = vmor %vm90, %vm91
    %v93 = vsel %vm92, %v84, %v89
    %v94 = vrsqrt.pop %v83
    %v95 = vmul.f32 %v94, %v83
    %v96 = vmul.f32 %v95, %v94
    %v97 = vmul.f32 0.5, %v96
    %v98 = vsub.f32 1.5, %v97
    %v99 = vmul.f32 %v94, %v98
    %vm100 = vweird.f32 %v83
    %vm101 = vweird.f32 %v94
    %vm102 = vmor %vm100, %vm101
    %v103 = vsel %vm102, %v94, %v99
    %v104 = vmul.f32 %v80, %v93
    %v105 = vmul.f32 %v81, %v103
    %v106 = vpack.c.bf16 %v105, %v104
    %v107 = vld [vmem:[#allocation5] sm:$0xf]
    %v108 = vld [vmem:[#allocation5 + $0x4] sm:$0xf]
    %v109 = vld [vmem:[#allocation5 + $0x8] sm:$0xf]
    %v110 = vld [vmem:[#allocation5 + $0xc] sm:$0xf]
    %v111 = vld [vmem:[%s2] sm:$0x1]
    %v113 = vperm.slane %v111, 0
    %v119 = vunpack.c.l.b16 %v107
    %v120 = vunpack.c.l.b16 %v108
    %v121 = vunpack.c.l.b16 %v109
    %v122 = vunpack.c.l.b16 %v110
    %v123 = vpack.c.b16 %v120, %v119
    %v124 = vpack.c.b16 %v122, %v121
    %v128 = vsel %vm50, %v106, 0
    %130 = vmatpush.bf16.msra.mxu0 0
    %131 = vmatpush.bf16.msra.mxu0 0
    %132 = vmatpush.bf16.msra.mxu0 0
    %133 = vmatpush.bf16.msra.mxu0 0
    %134 = vmatpush.bf16.msra.mxu0 0
    %135 = vmatpush.bf16.msra.mxu0 0
    %136 = vmatpush.bf16.msra.mxu0 %v124
    %137 = vmatpush.bf16.msra.mxu0 %v123
    %138 = vmatmul.bf16.gmra.mxu0 %v128
    %v139 = vpop.f32.mrf.mxu0
    %v140 = vadd.f32 %v113, %v139
    %v141 = vpop.f32.mrf.mxu0
    %v142 = vadd.f32 %v113, %v141
    %143 = vdwg.mxu0
    %144 = vst [vmem:[#allocation7] sm:$0xff] %v140
    %145 = vst [vmem:[#allocation7 + $0x8] sm:$0xff] %v142
    // Predicated region
    $region22: #{tpu_custom_call.1} parent=1 // pred_check
      _
    $region23: #{tpu_custom_call.1} parent=1 // pred_check_branch
      %147 = sbr.rel (0) target = $region25
    $region24: #{tpu_custom_call.1} parent=1 // pred_region
      %149 = vsyncadd [#allocation4], 0
      %s150 = sshll.u32 [#allocation7], 4
      %s151 = int_to_ptr.vmem [resolvable:$true] %s150
      %s152 = sshll.u32 %s3, 4
      %s153 = int_to_ptr.hbm [resolvable:$true] %s152
      %158 = dma.vmem_to_hbm [thread:$0]  %s151, 256, %s153, [#allocation4], 128, 128, 8
    $region25: #{tpu_custom_call.1} parent=1 // pred_fallthru
      _
    // Predicated region
    $region26: #{tpu_custom_call.1} parent=1 // pred_check
      _
    $region27: #{tpu_custom_call.1} parent=1 // pred_check_branch
      %160 = sbr.rel (0) target = $region29
    $region28: #{tpu_custom_call.1} parent=1 // pred_region
      %162 = dma.done [#allocation4], 256
    $region29: #{tpu_custom_call.1} parent=1 // pred_fallthru
      _
    %163 = vsyncpa [#allocation3], 1
    %164 = vsyncpa [#allocation6], 1
    %165 = vsyncpa [#allocation4], 1

</llo_original>
